<compile_context>
chip_gen: v5e
topology: v5e:2x2
jax: 0.10.0
libtpu: 0.0.40
codegen_flags: <defaults>
</compile_context>

<pallas_src>
import functools

import jax
import jax.numpy as jnp
from jax.experimental import pallas as pl
from jax.experimental.pallas import tpu as pltpu


def _round_up(x, m):
    return ((x + m - 1) // m) * m


# --------------------------------------------------------------------------
# Kernel 1: single-step GRU cell + maxout pre-activation (weights resident).
# --------------------------------------------------------------------------
def _gru_maxout_kernel(x_ref, mask_ref, h_ref, c_ref,
                       w_ih_ref, w_hh_ref, b_ih_ref, b_hh_ref,
                       w_e_ref, w_c_ref, b_e_ref, w_h_ref,
                       m_ref, h_new_ref):
    H = h_ref.shape[-1]
    cdt = w_ih_ref.dtype                       # MXU operand dtype (bf16)

    # Inverted dropout applied in-kernel: mask is host-generated and already
    # scaled by 1/(1-p)  (ones when not training).
    x = x_ref[...] * mask_ref[...]             # (B, H) f32
    h = h_ref[...]                             # (B, H) f32
    x16 = x.astype(cdt)
    h16 = h.astype(cdt)
    c16 = c_ref[...].astype(cdt)               # (B, C)

    # --- single-step GRU cell, torch gate order (r, z, n), f32 accumulate ---
    # NOTE: gate lane-slices are only tile-aligned when H % 128 == 0; other H
    # is correct but incurs intra-vreg relayout copies.
    gi = jnp.dot(x16, w_ih_ref[...],
                 preferred_element_type=jnp.float32) + b_ih_ref[...]
    gh = jnp.dot(h16, w_hh_ref[...],
                 preferred_element_type=jnp.float32) + b_hh_ref[...]
    r = jax.nn.sigmoid(gi[:, 0:H] + gh[:, 0:H])
    z = jax.nn.sigmoid(gi[:, H:2 * H] + gh[:, H:2 * H])
    n = jnp.tanh(gi[:, 2 * H:3 * H] + r * gh[:, 2 * H:3 * H])
    h_new = (1.0 - z) * n + z * h
    h_new_ref[...] = h_new

    # --- pre_active = Lin_e(x) + Lin_c(ctx) + Lin_h(h_new); Maxout(pool=2) ---
    # Weight columns were permuted host-side to [all-even | all-odd], so
    # Maxout(2) (max over adjacent column pairs) is a contiguous half-vs-half
    # maximum of two lane slices.
    pre = (jnp.dot(x16, w_e_ref[...], preferred_element_type=jnp.float32)
           + jnp.dot(c16, w_c_ref[...], preferred_element_type=jnp.float32)
           + jnp.dot(h_new.astype(cdt), w_h_ref[...],
                     preferred_element_type=jnp.float32)
           + b_e_ref[...])
    # Emit m in bf16 (kernel 2 consumes it directly as an MXU operand).
    m_ref[...] = jnp.maximum(pre[:, :H], pre[:, H:]).astype(m_ref.dtype)


# --------------------------------------------------------------------------
# Kernel 2: logits = m @ W_o * scale + b_o, tiled/streamed over V.
# W_o tiles are int8 (or bf16); dequant happens in VMEM, accumulate in f32,
# per-column scale applied to the (B, TN) result (cheap).
# --------------------------------------------------------------------------
def _vocab_proj_kernel(m_ref, w_o_ref, scale_ref, b_o_ref, logits_ref):
    w = w_o_ref[...]                               # (H, TN) int8 or bf16
    if w.dtype != m_ref.dtype:
        w = w.astype(jnp.float32).astype(m_ref.dtype)
    acc = jnp.dot(m_ref[...], w, preferred_element_type=jnp.float32)
    logits_ref[...] = acc * scale_ref[...] + b_o_ref[...]


# --------------------------------------------------------------------------
# Parameters
# --------------------------------------------------------------------------
def init_params(key, vocab_size, hidden_size, context_hidden_size):
    """Raw torch-layout parameters (as nn.GRU / nn.Linear store them)."""
    H, C, V = hidden_size, context_hidden_size, vocab_size
    ks = jax.random.split(key, 11)
    u = lambda k, shape, scale: jax.random.uniform(k, shape, jnp.float32, -scale, scale)
    s = 1.0 / jnp.sqrt(H)
    sc = 1.0 / jnp.sqrt(C)
    return dict(
        embedding=jax.random.normal(ks[0], (V, H), jnp.float32) * 0.1,
        w_ih=u(ks[1], (3 * H, H), s), w_hh=u(ks[2], (3 * H, H), s),
        b_ih=u(ks[3], (3 * H,), s), b_hh=u(ks[4], (3 * H,), s),
        w_e=u(ks[5], (2 * H, H), s), b_e=u(ks[6], (2 * H,), s),
        w_h=u(ks[7], (2 * H, H), s),
        w_c=u(ks[8], (2 * H, C), sc),
        w_o=u(ks[9], (V, H), s), b_o=u(ks[10], (V,), s),
    )


def prepare_params(raw, weight_dtype=jnp.bfloat16, w_o_format="int8",
                   vocab_tile_max=4096, proj_vmem_budget_bytes=24 << 20,
                   max_batch_hint=16):
    """One-time weight layout: call once at model-load time, reuse every step."""
    H = raw["w_ih"].shape[1]
    C = raw["w_c"].shape[1]
    V = raw["w_o"].shape[0]

    # Maxout(2) pools adjacent column pairs (2k, 2k+1): permute columns to
    # [all even | all odd] so the in-kernel max is two contiguous lane slices.
    perm = jnp.concatenate([jnp.arange(0, 2 * H, 2), jnp.arange(1, 2 * H, 2)])

    # ---- choose the vocab tile TN from a per-TensorCore VMEM budget ----
    wo_bytes = 1 if w_o_format == "int8" else jnp.dtype(weight_dtype).itemsize
    # double-buffered: W_o tile + scale tile + b_o tile + logits tile
    per_tn = 2 * (H * wo_bytes + 4 + 4 + max_batch_hint * 4)
    tn_cap = max(128, ((proj_vmem_budget_bytes - (2 << 20)) // per_tn) // 128 * 128)
    tn = min(vocab_tile_max, tn_cap, _round_up(V, 128))
    tn = max(128, (tn // 128) * 128)
    v_pad = _round_up(V, tn)
    n_tiles = v_pad // tn

    # ---- vocab projection weights: pad, (optionally) quantize, tile ----
    w_o_t = jnp.pad(raw["w_o"].T, ((0, 0), (0, v_pad - V)))       # (H, V_pad)
    if w_o_format == "int8":
        amax = jnp.max(jnp.abs(w_o_t), axis=0, keepdims=True)     # (1, V_pad)
        scale = jnp.maximum(amax, 1e-8) / 127.0
        w_o_p = jnp.clip(jnp.round(w_o_t / scale), -127, 127).astype(jnp.int8)
    else:
        scale = jnp.ones((1, v_pad), jnp.float32)
        w_o_p = w_o_t.astype(weight_dtype)
    # Tile-contiguous layout: tile j lives at w_o_tiles[j] == w_o_t[:, j*TN:(j+1)*TN]
    w_o_tiles = jnp.transpose(w_o_p.reshape(H, n_tiles, tn), (1, 0, 2))
    b_o = jnp.pad(raw["b_o"], (0, v_pad - V))[None, :]

    return dict(
        # static metadata (treat as static if jitting the wrapper)
        H=H, C=C, V=V, V_pad=v_pad, TN=tn, n_tiles=n_tiles,
        embedding=raw["embedding"],
        w_ih=raw["w_ih"].T.astype(weight_dtype),                  # (H, 3H)
        w_hh=raw["w_hh"].T.astype(weight_dtype),                  # (H, 3H)
        b_ih=raw["b_ih"][None, :].astype(jnp.float32),
        b_hh=raw["b_hh"][None, :].astype(jnp.float32),
        w_e=raw["w_e"].T[:, perm].astype(weight_dtype),           # (H, 2H)
        w_c=raw["w_c"].T[:, perm].astype(weight_dtype),           # (C, 2H)
        b_e=raw["b_e"][perm][None, :].astype(jnp.float32),
        w_h=raw["w_h"].T[:, perm].astype(weight_dtype),           # (H, 2H)
        w_o=w_o_tiles,                                            # (n_tiles, H, TN)
        w_o_scale=scale.astype(jnp.float32),                      # (1, V_pad)
        b_o=b_o.astype(jnp.float32),                              # (1, V_pad)
    )


# --------------------------------------------------------------------------
# Forward
# --------------------------------------------------------------------------
def hred_decoder_forward(prep, input_step, last_hidden, context_hidden,
                         dropout_rng=None, dropout_p=0.1, train=True):
    """input_step: (B, 1) int32; last_hidden: (1, B, H); context_hidden: (B, C).
    Returns (logits (B, V), hidden (1, B, H)) matching the torch module."""
    B = input_step.shape[0]
    H, C, V = prep["H"], prep["C"], prep["V"]
    V_pad, TN, n_tiles = prep["V_pad"], prep["TN"], prep["n_tiles"]

    # --- glue kept in XLA: embedding row gather + dropout keep-mask RNG ---
    embedded = jnp.take(prep["embedding"], input_step[:, 0], axis=0)   # (B, H)
    # torch F.dropout defaults to training=True; inverted dropout.
    # TODO(synk): RNG stream cannot bit-match torch's dropout mask.
    if train and dropout_p > 0.0:
        if dropout_rng is None:
            raise ValueError("dropout_rng is required when train=True and dropout_p > 0")
        keep = jax.random.bernoulli(dropout_rng, 1.0 - dropout_p, (B, H))
        mask = keep.astype(jnp.float32) / (1.0 - dropout_p)
    else:
        mask = jnp.ones((B, H), jnp.float32)

    x = embedded.astype(jnp.float32)
    h0 = last_hidden[0].astype(jnp.float32)                            # (B, H)
    ctx = context_hidden.astype(jnp.float32)                           # (B, C)

    vmem = pl.BlockSpec(memory_space=pltpu.MemorySpace.VMEM)
    wdt_bytes = jnp.dtype(prep["w_ih"].dtype).itemsize
    wo_bytes = jnp.dtype(prep["w_o"].dtype).itemsize

    # ---- kernel 1: GRU cell + maxout pre-activation (weights resident) ----
    # TODO(synk): for very large H/C (resident weights > ~48 MiB, e.g. on
    # v7x's 64 MiB VMEM) tile kernel 1 over the gate/maxout column axis.
    k1_weight_bytes = (10 * H * H + 2 * H * C) * wdt_bytes
    k1_vmem = (k1_weight_bytes + 8 * H * 4                 # weights + biases
               + B * (3 * H + C) * 4                       # x, mask, h, c
               + B * H * (2 + 4)                           # m, h_new outputs
               + B * 8 * H * 4)                            # gi / gh / pre temporaries
    k1_limit = min(int(1.2 * k1_vmem) + (4 << 20), 64 << 20)
    gru_cost = pl.CostEstimate(
        flops=int(2 * B * (10 * H * H + 2 * H * C)),
        transcendentals=int(B * 3 * H),
        bytes_accessed=int(k1_weight_bytes + 8 * H * 4
                           + B * (3 * H + C) * 4 + B * H * (2 + 4)))
    m, h_new = pl.pallas_call(
        _gru_maxout_kernel,
        out_shape=(jax.ShapeDtypeStruct((B, H), jnp.bfloat16),   # m (MXU-ready)
                   jax.ShapeDtypeStruct((B, H), jnp.float32)),   # h_new
        in_specs=[vmem] * 12,
        out_specs=(vmem, vmem),
        compiler_params=pltpu.CompilerParams(vmem_limit_bytes=k1_limit),
        cost_estimate=gru_cost,
    )(x, mask, h0, ctx,
      prep["w_ih"], prep["w_hh"], prep["b_ih"], prep["b_hh"],
      prep["w_e"], prep["w_c"], prep["b_e"], prep["w_h"])

    # ---- kernel 2: logits, streamed over V with tile-contiguous W_o ----
    # Real footprint (double buffers counted once) + fixed headroom.
    k2_vmem = (2 * H * TN * wo_bytes          # W_o tiles (x2 buffers)
               + 2 * 2 * TN * 4               # scale + b_o tiles
               + 2 * B * TN * 4               # logits tiles
               + 2 * B * H * 2)               # resident m
    k2_limit = min(int(k2_vmem) + (4 << 20), 64 << 20)
    proj_cost = pl.CostEstimate(
        flops=int(2 * B * H * V_pad + 2 * B * V_pad),
        transcendentals=0,
        bytes_accessed=int(H * V_pad * wo_bytes + 2 * V_pad * 4
                           + B * H * 2 + B * V_pad * 4))
    # NOTE: "parallel" shards the V axis across v7x's two TensorCores; on
    # single-TC chips it is a measured wash vs "arbitrary".
    # TODO(synk): if DMA is still exposed after enlarging TN, add
    # pipeline_mode=pl.Buffered(3) on the W_o BlockSpec.
    logits = pl.pallas_call(
        _vocab_proj_kernel,
        out_shape=jax.ShapeDtypeStruct((B, V_pad), jnp.float32),
        grid=(n_tiles,),
        in_specs=[pl.BlockSpec((B, H), lambda j: (0, 0)),
                  pl.BlockSpec((None, H, TN), lambda j: (j, 0, 0)),
                  pl.BlockSpec((1, TN), lambda j: (0, j)),
                  pl.BlockSpec((1, TN), lambda j: (0, j))],
        out_specs=pl.BlockSpec((B, TN), lambda j: (0, j)),
        compiler_params=pltpu.CompilerParams(
            dimension_semantics=("parallel",),
            vmem_limit_bytes=k2_limit),
        cost_estimate=proj_cost,
    )(m, prep["w_o"], prep["w_o_scale"], prep["b_o"])

    if V_pad != V:
        logits = logits[:, :V]
    return logits, h_new[None, :, :]


if __name__ == "__main__":
    B, H, C, V = 2, 32, 48, 64

    key = jax.random.PRNGKey(0)
    k_param, k_tok, k_hid, k_ctx, k_drop = jax.random.split(key, 5)

    raw = init_params(k_param, vocab_size=V, hidden_size=H, context_hidden_size=C)
    prep = prepare_params(raw, weight_dtype=jnp.bfloat16,
                          w_o_format="int8")          # one-time layout / quant

    input_step = jax.random.randint(k_tok, (B, 1), 0, V, dtype=jnp.int32)
    last_hidden = jax.random.normal(k_hid, (1, B, H), jnp.float32)
    context_hidden = jax.random.normal(k_ctx, (B, C), jnp.float32)

    logits, hidden = hred_decoder_forward(prep, input_step, last_hidden,
                                          context_hidden, dropout_rng=k_drop)
    jax.block_until_ready((logits, hidden))

    assert logits.shape == (B, V) and hidden.shape == (1, B, H)
    assert bool(jnp.all(jnp.isfinite(logits))) and bool(jnp.all(jnp.isfinite(hidden)))
    print("KERNEL_OK")
</pallas_src>

<mosaic_0001>
module attributes {stable_mosaic.version = 11 : i64} {
  func.func @_gru_maxout_kernel(%arg0: memref<2x32xf32, #tpu.memory_space<vmem>>, %arg1: memref<2x32xf32, #tpu.memory_space<vmem>>, %arg2: memref<2x32xf32, #tpu.memory_space<vmem>>, %arg3: memref<2x48xf32, #tpu.memory_space<vmem>>, %arg4: memref<32x96xbf16, #tpu.memory_space<vmem>>, %arg5: memref<32x96xbf16, #tpu.memory_space<vmem>>, %arg6: memref<1x96xf32, #tpu.memory_space<vmem>>, %arg7: memref<1x96xf32, #tpu.memory_space<vmem>>, %arg8: memref<32x64xbf16, #tpu.memory_space<vmem>>, %arg9: memref<48x64xbf16, #tpu.memory_space<vmem>>, %arg10: memref<1x64xf32, #tpu.memory_space<vmem>>, %arg11: memref<32x64xbf16, #tpu.memory_space<vmem>>, %arg12: memref<2x32xbf16, #tpu.memory_space<vmem>>, %arg13: memref<2x32xf32, #tpu.memory_space<vmem>>) attributes {dimension_semantics = [], scalar_prefetch = 0 : i64, scratch_operands = 0 : i64, tpu.core_type = #tpu.core_type<tc>} {
    %c0 = arith.constant 0 : index
    %c0_0 = arith.constant 0 : index
    %0 = vector.load %arg0[%c0, %c0_0] : memref<2x32xf32, #tpu.memory_space<vmem>>, vector<2x32xf32>
    %c0_1 = arith.constant 0 : index
    %c0_2 = arith.constant 0 : index
    %1 = vector.load %arg1[%c0_1, %c0_2] : memref<2x32xf32, #tpu.memory_space<vmem>>, vector<2x32xf32>
    %2 = arith.mulf %0, %1 : vector<2x32xf32>
    %c0_3 = arith.constant 0 : index
    %c0_4 = arith.constant 0 : index
    %3 = vector.load %arg2[%c0_3, %c0_4] : memref<2x32xf32, #tpu.memory_space<vmem>>, vector<2x32xf32>
    %4 = arith.truncf %2 : vector<2x32xf32> to vector<2x32xbf16>
    %5 = arith.truncf %3 : vector<2x32xf32> to vector<2x32xbf16>
    %c0_5 = arith.constant 0 : index
    %c0_6 = arith.constant 0 : index
    %6 = vector.load %arg3[%c0_5, %c0_6] : memref<2x48xf32, #tpu.memory_space<vmem>>, vector<2x48xf32>
    %7 = arith.truncf %6 : vector<2x48xf32> to vector<2x48xbf16>
    %c0_7 = arith.constant 0 : index
    %c0_8 = arith.constant 0 : index
    %8 = vector.load %arg4[%c0_7, %c0_8] : memref<32x96xbf16, #tpu.memory_space<vmem>>, vector<32x96xbf16>
    %cst = arith.constant dense<0.000000e+00> : vector<2x96xf32>
    %9 = tpu.matmul %4, %8, %cst {dimension_numbers = #tpu.dot_dimension_numbers<[1], [0], [0], [1], [0, 0, 1, 1], [], []>} : vector<2x32xbf16>, vector<32x96xbf16>, vector<2x96xf32> -> vector<2x96xf32>
    %c0_9 = arith.constant 0 : index
    %c0_10 = arith.constant 0 : index
    %10 = vector.load %arg6[%c0_9, %c0_10] : memref<1x96xf32, #tpu.memory_space<vmem>>, vector<1x96xf32>
    %11 = vector.broadcast %10 : vector<1x96xf32> to vector<2x96xf32>
    %12 = arith.addf %9, %11 : vector<2x96xf32>
    %c0_11 = arith.constant 0 : index
    %c0_12 = arith.constant 0 : index
    %13 = vector.load %arg5[%c0_11, %c0_12] : memref<32x96xbf16, #tpu.memory_space<vmem>>, vector<32x96xbf16>
    %cst_13 = arith.constant dense<0.000000e+00> : vector<2x96xf32>
    %14 = tpu.matmul %5, %13, %cst_13 {dimension_numbers = #tpu.dot_dimension_numbers<[1], [0], [0], [1], [0, 0, 1, 1], [], []>} : vector<2x32xbf16>, vector<32x96xbf16>, vector<2x96xf32> -> vector<2x96xf32>
    %c0_14 = arith.constant 0 : index
    %c0_15 = arith.constant 0 : index
    %15 = vector.load %arg7[%c0_14, %c0_15] : memref<1x96xf32, #tpu.memory_space<vmem>>, vector<1x96xf32>
    %16 = vector.broadcast %15 : vector<1x96xf32> to vector<2x96xf32>
    %17 = arith.addf %14, %16 : vector<2x96xf32>
    %18 = vector.extract_strided_slice %12 {offsets = [0, 0], sizes = [2, 32], strides = [1, 1]} : vector<2x96xf32> to vector<2x32xf32>
    %19 = vector.extract_strided_slice %17 {offsets = [0, 0], sizes = [2, 32], strides = [1, 1]} : vector<2x96xf32> to vector<2x32xf32>
    %20 = arith.addf %18, %19 : vector<2x32xf32>
    %21 = arith.negf %20 : vector<2x32xf32>
    %22 = math.exp %21 : vector<2x32xf32>
    %cst_16 = arith.constant 1.000000e+00 : f32
    %23 = vector.broadcast %cst_16 : f32 to vector<2x32xf32>
    %24 = arith.addf %23, %22 : vector<2x32xf32>
    %25 = arith.divf %23, %24 : vector<2x32xf32>
    %26 = vector.extract_strided_slice %12 {offsets = [0, 32], sizes = [2, 32], strides = [1, 1]} : vector<2x96xf32> to vector<2x32xf32>
    %27 = vector.extract_strided_slice %17 {offsets = [0, 32], sizes = [2, 32], strides = [1, 1]} : vector<2x96xf32> to vector<2x32xf32>
    %28 = arith.addf %26, %27 : vector<2x32xf32>
    %29 = arith.negf %28 : vector<2x32xf32>
    %30 = math.exp %29 : vector<2x32xf32>
    %cst_17 = arith.constant 1.000000e+00 : f32
    %31 = vector.broadcast %cst_17 : f32 to vector<2x32xf32>
    %32 = arith.addf %31, %30 : vector<2x32xf32>
    %33 = arith.divf %31, %32 : vector<2x32xf32>
    %34 = vector.extract_strided_slice %12 {offsets = [0, 64], sizes = [2, 32], strides = [1, 1]} : vector<2x96xf32> to vector<2x32xf32>
    %35 = vector.extract_strided_slice %17 {offsets = [0, 64], sizes = [2, 32], strides = [1, 1]} : vector<2x96xf32> to vector<2x32xf32>
    %36 = arith.mulf %25, %35 : vector<2x32xf32>
    %37 = arith.addf %34, %36 : vector<2x32xf32>
    %38 = math.tanh %37 : vector<2x32xf32>
    %cst_18 = arith.constant 1.000000e+00 : f32
    %39 = vector.broadcast %cst_18 : f32 to vector<2x32xf32>
    %40 = arith.subf %39, %33 : vector<2x32xf32>
    %41 = arith.mulf %40, %38 : vector<2x32xf32>
    %42 = arith.mulf %33, %3 : vector<2x32xf32>
    %43 = arith.addf %41, %42 : vector<2x32xf32>
    %c0_19 = arith.constant 0 : index
    %c0_20 = arith.constant 0 : index
    %44 = vector.load %arg13[%c0_19, %c0_20] : memref<2x32xf32, #tpu.memory_space<vmem>>, vector<2x32xf32>
    tpu.vector_store %arg13[%c0_19, %c0_20], %43 {strides = array<i32>} : memref<2x32xf32, #tpu.memory_space<vmem>>, vector<2x32xf32>,
    %c0_21 = arith.constant 0 : index
    %c0_22 = arith.constant 0 : index
    %45 = vector.load %arg8[%c0_21, %c0_22] : memref<32x64xbf16, #tpu.memory_space<vmem>>, vector<32x64xbf16>
    %cst_23 = arith.constant dense<0.000000e+00> : vector<2x64xf32>
    %46 = tpu.matmul %4, %45, %cst_23 {dimension_numbers = #tpu.dot_dimension_numbers<[1], [0], [0], [1], [0, 0, 1, 1], [], []>} : vector<2x32xbf16>, vector<32x64xbf16>, vector<2x64xf32> -> vector<2x64xf32>
    %c0_24 = arith.constant 0 : index
    %c0_25 = arith.constant 0 : index
    %47 = vector.load %arg9[%c0_24, %c0_25] : memref<48x64xbf16, #tpu.memory_space<vmem>>, vector<48x64xbf16>
    %cst_26 = arith.constant dense<0.000000e+00> : vector<2x64xf32>
    %48 = tpu.matmul %7, %47, %cst_26 {dimension_numbers = #tpu.dot_dimension_numbers<[1], [0], [0], [1], [0, 0, 1, 1], [], []>} : vector<2x48xbf16>, vector<48x64xbf16>, vector<2x64xf32> -> vector<2x64xf32>
    %49 = arith.addf %46, %48 : vector<2x64xf32>
    %50 = arith.truncf %43 : vector<2x32xf32> to vector<2x32xbf16>
    %c0_27 = arith.constant 0 : index
    %c0_28 = arith.constant 0 : index
    %51 = vector.load %arg11[%c0_27, %c0_28] : memref<32x64xbf16, #tpu.memory_space<vmem>>, vector<32x64xbf16>
    %cst_29 = arith.constant dense<0.000000e+00> : vector<2x64xf32>
    %52 = tpu.matmul %50, %51, %cst_29 {dimension_numbers = #tpu.dot_dimension_numbers<[1], [0], [0], [1], [0, 0, 1, 1], [], []>} : vector<2x32xbf16>, vector<32x64xbf16>, vector<2x64xf32> -> vector<2x64xf32>
    %53 = arith.addf %49, %52 : vector<2x64xf32>
    %c0_30 = arith.constant 0 : index
    %c0_31 = arith.constant 0 : index
    %54 = vector.load %arg10[%c0_30, %c0_31] : memref<1x64xf32, #tpu.memory_space<vmem>>, vector<1x64xf32>
    %55 = vector.broadcast %54 : vector<1x64xf32> to vector<2x64xf32>
    %56 = arith.addf %53, %55 : vector<2x64xf32>
    %57 = vector.extract_strided_slice %56 {offsets = [0, 0], sizes = [2, 32], strides = [1, 1]} : vector<2x64xf32> to vector<2x32xf32>
    %58 = vector.extract_strided_slice %56 {offsets = [0, 32], sizes = [2, 32], strides = [1, 1]} : vector<2x64xf32> to vector<2x32xf32>
    %59 = arith.maximumf %57, %58 : vector<2x32xf32>
    %60 = arith.truncf %59 : vector<2x32xf32> to vector<2x32xbf16>
    %c0_32 = arith.constant 0 : index
    %c0_33 = arith.constant 0 : index
    %61 = vector.load %arg12[%c0_32, %c0_33] : memref<2x32xbf16, #tpu.memory_space<vmem>>, vector<2x32xbf16>
    tpu.vector_store %arg12[%c0_32, %c0_33], %60 {strides = array<i32>} : memref<2x32xbf16, #tpu.memory_space<vmem>>, vector<2x32xbf16>,
    return
  }
}

</mosaic_0001>

<llo_original>
// kernel: tpu_custom_call.1
$region0: #{tpu_custom_call.1}
  #allocation0 [shape = 'u32[]', space=smem, size = 0x4, offset = 0x4, fixed_abs, tag = 'smem constant byte address 0x4 - core index']
  #allocation1 [shape = 'u32[72,128]{1,0:T(1,128)}', space=vmem, size = 0x9000, scoped, tag = 'internal scratch']
  %s0 = inlined_call_operand.hbm [shape: f32[2,32], index: 0, kind: input, shape index: {}]
  %s1 = inlined_call_operand.hbm [shape: f32[2,32], index: 1, kind: input, shape index: {}]
  %s2 = inlined_call_operand.hbm [shape: f32[2,32], index: 2, kind: input, shape index: {}]
  %s3 = inlined_call_operand.vmem [shape: f32[2,48], index: 3, kind: input, shape index: {}]
  %s4 = inlined_call_operand.hbm [shape: bf16[32,96], index: 4, kind: input, shape index: {}]
  %s5 = inlined_call_operand.hbm [shape: bf16[32,96], index: 5, kind: input, shape index: {}]
  %s6 = inlined_call_operand.vmem [shape: f32[1,96], index: 6, kind: input, shape index: {}]
  %s7 = inlined_call_operand.vmem [shape: f32[1,96], index: 7, kind: input, shape index: {}]
  %s8 = inlined_call_operand.hbm [shape: bf16[32,64], index: 8, kind: input, shape index: {}]
  %s9 = inlined_call_operand.hbm [shape: bf16[48,64], index: 9, kind: input, shape index: {}]
  %s10 = inlined_call_operand.vmem [shape: f32[1,64], index: 10, kind: input, shape index: {}]
  %s11 = inlined_call_operand.hbm [shape: bf16[32,64], index: 11, kind: input, shape index: {}]
  %s12 = inlined_call_operand.hbm [shape: bf16[2,32], index: 12, kind: output, shape index: {0}]
  %s13 = inlined_call_operand.hbm [shape: f32[2,32], index: 13, kind: output, shape index: {1}]
  %14 = xla_tuple %s12, %s13
  %s15 = sld [smem:[#allocation0]]
  $region98: #{tpu_custom_call.1} parent=0
    _
  %s17 = ssub.s32 1, %s15
  %s18 = scalar_select 0, %s17, %s15
  $region1: #{tpu_custom_call.1} parent=0
    #allocation2 [shape = 'u8[1024]{0}', space=vmem, size = 0x400, scoped, tag = 'input window, operand 0, single buffered']
    #allocation3 [shape = 's32[1]{0}', space=sflag, size = 0x4, scoped, tag = 'scoped memory for tpu_custom_call.1']
    #allocation4 [shape = 's32[1]{0}', space=sflag, size = 0x4, scoped, tag = 'scoped memory for tpu_custom_call.1']
    #allocation5 [shape = 'u8[1024]{0}', space=vmem, size = 0x400, scoped, tag = 'input window, operand 1, single buffered']
    #allocation6 [shape = 's32[1]{0}', space=sflag, size = 0x4, scoped, tag = 'scoped memory for tpu_custom_call.1']
    #allocation7 [shape = 'u8[1024]{0}', space=vmem, size = 0x400, scoped, tag = 'input window, operand 2, single buffered']
    #allocation8 [shape = 'u8[8192]{0}', space=vmem, size = 0x2000, scoped, tag = 'input window, operand 4, single buffered']
    #allocation9 [shape = 's32[1]{0}', space=sflag, size = 0x4, scoped, tag = 'scoped memory for tpu_custom_call.1']
    #allocation10 [shape = 'u8[8192]{0}', space=vmem, size = 0x2000, scoped, tag = 'input window, operand 5, single buffered']
    #allocation11 [shape = 'u8[8192]{0}', space=vmem, size = 0x2000, scoped, tag = 'input window, operand 8, single buffered']
    #allocation12 [shape = 's32[1]{0}', space=sflag, size = 0x4, scoped, tag = 'scoped memory for tpu_custom_call.1']
    #allocation13 [shape = 'u8[12288]{0}', space=vmem, size = 0x3000, scoped, tag = 'input window, operand 9, single buffered']
    #allocation14 [shape = 'u8[8192]{0}', space=vmem, size = 0x2000, scoped, tag = 'input window, operand 11, single buffered']
    #allocation15 [shape = 's32[1]{0}', space=sflag, size = 0x4, scoped, tag = 'scoped memory for tpu_custom_call.1']
    #allocation16 [shape = 'u8[512]{0}', space=vmem, size = 0x400, scoped, tag = 'output window, operand 0, single buffered']
    #allocation17 [shape = 'u8[1024]{0}', space=vmem, size = 0x400, scoped, tag = 'output window, operand 1, single buffered']
    #allocation18 [shape = 's32[1]{0}', space=sflag, size = 0x4, scoped, tag = 'scoped memory for tpu_custom_call.1']
    %19 = vsyncpa [#allocation3], 0
    %20 = vsyncpa [#allocation6], 0
    %21 = vsyncpa [#allocation9], 0
    %22 = vsyncpa [#allocation12], 0
    %23 = vsyncpa [#allocation15], 0
    %24 = vsyncpa [#allocation4], 0
    %25 = vsyncpa [#allocation18], 0
    // Predicated region
    $region2: #{tpu_custom_call.1} parent=1 // pred_check
      _
    $region3: #{tpu_custom_call.1} parent=1 // pred_check_branch
      %27 = sbr.rel (0) target = $region5
    $region4: #{tpu_custom_call.1} parent=1 // pred_region
      %29 = vsyncadd [#allocation3], 0
      %s31 = sshll.u32 %s0, 4
      %s32 = int_to_ptr.hbm [resolvable:$true] %s31
      %s33 = sshll.u32 [#allocation2], 4
      %s34 = int_to_ptr.vmem [resolvable:$true] %s33
      %36 = dma.hbm_to_vmem [thread:$0]  %s32, 32, %s34, [#allocation3]
    $region5: #{tpu_custom_call.1} parent=1 // pred_fallthru
      _
    // Predicated region
    $region6: #{tpu_custom_call.1} parent=1 // pred_check
      _
    $region7: #{tpu_custom_call.1} parent=1 // pred_check_branch
      %38 = sbr.rel (0) target = $region9
    $region8: #{tpu_custom_call.1} parent=1 // pred_region
      %40 = vsyncadd [#allocation6], 0
      %s42 = sshll.u32 %s1, 4
      %s43 = int_to_ptr.hbm [resolvable:$true] %s42
      %s44 = sshll.u32 [#allocation5], 4
      %s45 = int_to_ptr.vmem [resolvable:$true] %s44
      %47 = dma.hbm_to_vmem [thread:$0]  %s43, 32, %s45, [#allocation6]
    $region9: #{tpu_custom_call.1} parent=1 // pred_fallthru
      _
    // Predicated region
    $region10: #{tpu_custom_call.1} parent=1 // pred_check
      _
    $region11: #{tpu_custom_call.1} parent=1 // pred_check_branch
      %49 = sbr.rel (0) target = $region13
    $region12: #{tpu_custom_call.1} parent=1 // pred_region
      %51 = vsyncadd [#allocation6], 0
      %s53 = sshll.u32 %s2, 4
      %s54 = int_to_ptr.hbm [resolvable:$true] %s53
      %s55 = sshll.u32 [#allocation7], 4
      %s56 = int_to_ptr.vmem [resolvable:$true] %s55
      %58 = dma.hbm_to_vmem [thread:$0]  %s54, 32, %s56, [#allocation6]
    $region13: #{tpu_custom_call.1} parent=1 // pred_fallthru
      _
    // Predicated region
    $region14: #{tpu_custom_call.1} parent=1 // pred_check
      _
    $region15: #{tpu_custom_call.1} parent=1 // pred_check_branch
      %60 = sbr.rel (0) target = $region17
    $region16: #{tpu_custom_call.1} parent=1 // pred_region
      _
    $region17: #{tpu_custom_call.1} parent=1 // pred_fallthru
      _
    // Predicated region
    $region18: #{tpu_custom_call.1} parent=1 // pred_check
      _
    $region19: #{tpu_custom_call.1} parent=1 // pred_check_branch
      %62 = sbr.rel (0) target = $region21
    $region20: #{tpu_custom_call.1} parent=1 // pred_region
      %64 = vsyncadd [#allocation9], 0
      %s65 = sshll.u32 %s4, 4
      %s66 = int_to_ptr.hbm [resolvable:$true] %s65
      %s67 = sshll.u32 [#allocation8], 4
      %s68 = int_to_ptr.vmem [resolvable:$true] %s67
      %73 = dma.hbm_to_vmem [thread:$0]  %s66, 256, %s68, [#allocation9], 64, 64, 4
    $region21: #{tpu_custom_call.1} parent=1 // pred_fallthru
      _
    // Predicated region
    $region22: #{tpu_custom_call.1} parent=1 // pred_check
      _
    $region23: #{tpu_custom_call.1} parent=1 // pred_check_branch
      %75 = sbr.rel (0) target = $region25
    $region24: #{tpu_custom_call.1} parent=1 // pred_region
      %77 = vsyncadd [#allocation9], 0
      %s78 = sshll.u32 %s5, 4
      %s79 = int_to_ptr.hbm [resolvable:$true] %s78
      %s80 = sshll.u32 [#allocation10], 4
      %s81 = int_to_ptr.vmem [resolvable:$true] %s80
      %86 = dma.hbm_to_vmem [thread:$0]  %s79, 256, %s81, [#allocation9], 64, 64, 4
    $region25: #{tpu_custom_call.1} parent=1 // pred_fallthru
      _
    // Predicated region
    $region26: #{tpu_custom_call.1} parent=1 // pred_check
      _
    $region27: #{tpu_custom_call.1} parent=1 // pred_check_branch
      %88 = sbr.rel (0) target = $region29
    $region28: #{tpu_custom_call.1} parent=1 // pred_region
      _
    $region29: #{tpu_custom_call.1} parent=1 // pred_fallthru
      _
    // Predicated region
    $region30: #{tpu_custom_call.1} parent=1 // pred_check
      _
    $region31: #{tpu_custom_call.1} parent=1 // pred_check_branch
      %90 = sbr.rel (0) target = $region33
    $region32: #{tpu_custom_call.1} parent=1 // pred_region
      _
    $region33: #{tpu_custom_call.1} parent=1 // pred_fallthru
      _
    // Predicated region
    $region34: #{tpu_custom_call.1} parent=1 // pred_check
      _
    $region35: #{tpu_custom_call.1} parent=1 // pred_check_branch
      %92 = sbr.rel (0) target = $region37
    $region36: #{tpu_custom_call.1} parent=1 // pred_region
      %94 = vsyncadd [#allocation12], 0
      %s95 = sshll.u32 %s8, 4
      %s96 = int_to_ptr.hbm [resolvable:$true] %s95
      %s97 = sshll.u32 [#allocation11], 4
      %s98 = int_to_ptr.vmem [resolvable:$true] %s97
      %103 = dma.hbm_to_vmem [thread:$0]  %s96, 256, %s98, [#allocation12], 64, 64, 4
    $region37: #{tpu_custom_call.1} parent=1 // pred_fallthru
      _
    // Predicated region
    $region38: #{tpu_custom_call.1} parent=1 // pred_check
      _
    $region39: #{tpu_custom_call.1} parent=1 // pred_check_branch
      %105 = sbr.rel (0) target = $region41
    $region40: #{tpu_custom_call.1} parent=1 // pred_region
      %107 = vsyncadd [#allocation12], 0
      %s108 = sshll.u32 %s9, 4
      %s109 = int_to_ptr.hbm [resolvable:$true] %s108
      %s110 = sshll.u32 [#allocation13], 4
      %s111 = int_to_ptr.vmem [resolvable:$true] %s110
      %116 = dma.hbm_to_vmem [thread:$0]  %s109, 384, %s111, [#allocation12], 64, 64, 4
    $region41: #{tpu_custom_call.1} parent=1 // pred_fallthru
      _
    // Predicated region
    $region42: #{tpu_custom_call.1} parent=1 // pred_check
      _
    $region43: #{tpu_custom_call.1} parent=1 // pred_check_branch
      %118 = sbr.rel (0) target = $region45
    $region44: #{tpu_custom_call.1} parent=1 // pred_region
      _
    $region45: #{tpu_custom_call.1} parent=1 // pred_fallthru
      _
    // Predicated region
    $region46: #{tpu_custom_call.1} parent=1 // pred_check
      _
    $region47: #{tpu_custom_call.1} parent=1 // pred_check_branch
      %120 = sbr.rel (0) target = $region49
    $region48: #{tpu_custom_call.1} parent=1 // pred_region
      %122 = vsyncadd [#allocation15], 0
      %s123 = sshll.u32 %s11, 4
      %s124 = int_to_ptr.hbm [resolvable:$true] %s123
      %s125 = sshll.u32 [#allocation14], 4
      %s126 = int_to_ptr.vmem [resolvable:$true] %s125
      %131 = dma.hbm_to_vmem [thread:$0]  %s124, 256, %s126, [#allocation15], 64, 64, 4
    $region49: #{tpu_custom_call.1} parent=1 // pred_fallthru
      _
    // Predicated region
    $region50: #{tpu_custom_call.1} parent=1 // pred_check
      _
    $region51: #{tpu_custom_call.1} parent=1 // pred_check_branch
      %133 = sbr.rel (0) target = $region53
    $region52: #{tpu_custom_call.1} parent=1 // pred_region
      %135 = dma.done [#allocation3], 32
    $region53: #{tpu_custom_call.1} parent=1 // pred_fallthru
      _
    // Predicated region
    $region54: #{tpu_custom_call.1} parent=1 // pred_check
      _
    $region55: #{tpu_custom_call.1} parent=1 // pred_check_branch
      %137 = sbr.rel (0) target = $region57
    $region56: #{tpu_custom_call.1} parent=1 // pred_region
      %139 = dma.done [#allocation6], 32
    $region57: #{tpu_custom_call.1} parent=1 // pred_fallthru
      _
    // Predicated region
    $region58: #{tpu_custom_call.1} parent=1 // pred_check
      _
    $region59: #{tpu_custom_call.1} parent=1 // pred_check_branch
      %141 = sbr.rel (0) target = $region61
    $region60: #{tpu_custom_call.1} parent=1 // pred_region
      %143 = dma.done [#allocation6], 32
    $region61: #{tpu_custom_call.1} parent=1 // pred_fallthru
      _
    // Predicated region
    $region62: #{tpu_custom_call.1} parent=1 // pred_check
      _
    $region63: #{tpu_custom_call.1} parent=1 // pred_check_branch
      %145 = sbr.rel (0) target = $region65
    $region64: #{tpu_custom_call.1} parent=1 // pred_region
      %147 = dma.done [#allocation9], 256
    $region65: #{tpu_custom_call.1} parent=1 // pred_fallthru
      _
    // Predicated region
    $region66: #{tpu_custom_call.1} parent=1 // pred_check
      _
    $region67: #{tpu_custom_call.1} parent=1 // pred_check_branch
      %149 = sbr.rel (0) target = $region69
    $region68: #{tpu_custom_call.1} parent=1 // pred_region
      %151 = dma.done [#allocation9], 256
    $region69: #{tpu_custom_call.1} parent=1 // pred_fallthru
      _
    // Predicated region
    $region70: #{tpu_custom_call.1} parent=1 // pred_check
      _
    $region71: #{tpu_custom_call.1} parent=1 // pred_check_branch
      %153 = sbr.rel (0) target = $region73
    $region72: #{tpu_custom_call.1} parent=1 // pred_region
      %155 = dma.done [#allocation12], 256
    $region73: #{tpu_custom_call.1} parent=1 // pred_fallthru
      _
    // Predicated region
    $region74: #{tpu_custom_call.1} parent=1 // pred_check
      _
    $region75: #{tpu_custom_call.1} parent=1 // pred_check_branch
      %157 = sbr.rel (0) target = $region77
    $region76: #{tpu_custom_call.1} parent=1 // pred_region
      %159 = dma.done [#allocation12], 384
    $region77: #{tpu_custom_call.1} parent=1 // pred_fallthru
      _
    // Predicated region
    $region78: #{tpu_custom_call.1} parent=1 // pred_check
      _
    $region79: #{tpu_custom_call.1} parent=1 // pred_check_branch
      %161 = sbr.rel (0) target = $region81
    $region80: #{tpu_custom_call.1} parent=1 // pred_region
      %163 = dma.done [#allocation15], 256
    $region81: #{tpu_custom_call.1} parent=1 // pred_fallthru
      _
    %v165 = vld [vmem:[#allocation2] sm:$0x3]
    %v166 = vld [vmem:[#allocation5] sm:$0x3]
    %v167 = vmul.f32 %v165, %v166
    %v168 = vld [vmem:[#allocation7] sm:$0x3]
    %v169 = vpack.c.bf16 %v167, %v167
    %v170 = vpack.c.bf16 %v168, %v168
    %v171 = vld [vmem:[%s3] sm:$0x3]
    %v172 = vpack.c.bf16 %v171, %v171
    %v173 = vld [vmem:[#allocation8] sm:$0xf]
    %v174 = vld [vmem:[#allocation8 + $0x4] sm:$0xf]
    %v175 = vld [vmem:[#allocation8 + $0x8] sm:$0xf]
    %v176 = vld [vmem:[#allocation8 + $0xc] sm:$0xf]
    %v177 = vld [vmem:[%s6] sm:$0x1]
    %v179 = vperm.slane %v177, 0
    %v185 = vunpack.c.l.b16 %v173
    %v186 = vunpack.c.l.b16 %v174
    %v187 = vunpack.c.l.b16 %v175
    %v188 = vunpack.c.l.b16 %v176
    %v189 = vpack.c.b16 %v186, %v185
    %v190 = vpack.c.b16 %v188, %v187
    %vm193 = vcmask 261120
    %v195 = vsel %vm193, %v169, 0
    %197 = vmatpush.bf16.msra.mxu0 0
    %198 = vmatpush.bf16.msra.mxu0 0
    %199 = vmatpush.bf16.msra.mxu0 0
    %200 = vmatpush.bf16.msra.mxu0 0
    %201 = vmatpush.bf16.msra.mxu0 0
    %202 = vmatpush.bf16.msra.mxu0 0
    %203 = vmatpush.bf16.msra.mxu0 %v190
    %204 = vmatpush.bf16.msra.mxu0 %v189
    %205 = vmatmul.bf16.gmra.mxu0 %v195
    %v206 = vpop.f32.mrf.mxu0
    %v207 = vadd.f32 %v179, %v206
    %v208 = vpop.f32.mrf.mxu0
    %209 = vdwg.mxu0
    %v210 = vld [vmem:[#allocation10] sm:$0xf]
    %v211 = vld [vmem:[#allocation10 + $0x4] sm:$0xf]
    %v212 = vld [vmem:[#allocation10 + $0x8] sm:$0xf]
    %v213 = vld [vmem:[#allocation10 + $0xc] sm:$0xf]
    %v214 = vld [vmem:[%s7] sm:$0x1]
    %v216 = vperm.slane %v214, 0
    %v222 = vunpack.c.l.b16 %v210
    %v223 = vunpack.c.l.b16 %v211
    %v224 = vunpack.c.l.b16 %v212
    %v225 = vunpack.c.l.b16 %v213
    %v226 = vpack.c.b16 %v223, %v222
    %v227 = vpack.c.b16 %v225, %v224
    %v231 = vsel %vm193, %v170, 0
    %233 = vmatpush.bf16.msra.mxu0 0
    %234 = vmatpush.bf16.msra.mxu0 0
    %235 = vmatpush.bf16.msra.mxu0 0
    %236 = vmatpush.bf16.msra.mxu0 0
    %237 = vmatpush.bf16.msra.mxu0 0
    %238 = vmatpush.bf16.msra.mxu0 0
    %239 = vmatpush.bf16.msra.mxu0 %v227
    %240 = vmatpush.bf16.msra.mxu0 %v226
    %241 = vmatmul.bf16.gmra.mxu0 %v231
    %v242 = vpop.f32.mrf.mxu0
    %v243 = vadd.f32 %v216, %v242
    %v244 = vpop.f32.mrf.mxu0
    %245 = vdwg.mxu0
    %v246 = vadd.f32 %v207, %v243
    %v247 = vxor.u32 %v246, 2147483648
    %v248 = vmul.f32 %v247, 1.442695
    %v249 = vpow.pop %v248
    %v250 = vadd.f32 %v249, 1.0
    %v251 = vrcp.pop %v250
    %v252 = vmul.f32 %v250, %v251
    %v253 = vsub.f32 1.0, %v252
    %v254 = vmul.f32 %v251, %v253
    %v255 = vadd.f32 %v251, %v254
    %vm256 = vweird.f32 %v250
    %vm257 = vweird.f32 %v251
    %vm258 = vmor %vm256, %vm257
    %v259 = vsel %vm258, %v251, %v255
    %v260 = vand.u32 2147483647, %v250
    %vm261 = vcmp.eq.f32.partialorder %v260, 8.507059e+37
    %v262 = vand.u32 %v250, 2147483648
    %v263 = vor.u32 1.1754944e-38, %v262
    %v264 = vsel %vm261, %v263, %v259
    %v265 = vmul.f32 1.0, %v264
    %267 = vrot.lane.b32.xlu0 %v243, 64
    %v268 = vpop.permute.xlu0 %267
    %v270 = vmul.f32 %v265, %v268
    %272 = vrot.lane.b32.xlu0 %v270, 64
    %v273 = vpop.permute.xlu0 %272
    %v275 = vadd.f32 %v207, %v273
    %v276 = vtanh.pop %v275
    %v277 = vsub.f32 1.0, %v265
    %279 = vrot.lane.b32.xlu0 %v276, 96
    %v280 = vpop.permute.xlu0 %279
    %v282 = vmul.f32 %v277, %v280
    %284 = vrot.lane.b32.xlu0 %v168, 32
    %v285 = vpop.permute.xlu0 %284
    %v287 = vmul.f32 %v265, %v285
    %v288 = vadd.f32 %v282, %v287
    %290 = vrot.lane.b32.xlu0 %v288, 96
    %v291 = vpop.permute.xlu0 %290
    %vm293 = vcmask 254976
    %294 = vst.msk [vmem:[#allocation17] sm:$0x3] %vm293, %v291
    %v295 = vld [vmem:[#allocation11] sm:$0xf]
    %v296 = vld [vmem:[#allocation11 + $0x4] sm:$0xf]
    %v297 = vld [vmem:[#allocation11 + $0x8] sm:$0xf]
    %v298 = vld [vmem:[#allocation11 + $0xc] sm:$0xf]
    %v299 = vld [vmem:[#allocation13] sm:$0xf]
    %v300 = vld [vmem:[#allocation13 + $0x4] sm:$0xf]
    %v301 = vld [vmem:[#allocation13 + $0x8] sm:$0xf]
    %v302 = vld [vmem:[#allocation13 + $0xc] sm:$0xf]
    %v303 = vld [vmem:[#allocation13 + $0x10] sm:$0xf]
    %v304 = vld [vmem:[#allocation13 + $0x14] sm:$0xf]
    %v311 = vunpack.c.l.b16 %v299
    %v312 = vunpack.c.l.b16 %v300
    %v313 = vunpack.c.l.b16 %v301
    %v314 = vunpack.c.l.b16 %v302
    %v315 = vunpack.c.l.b16 %v303
    %v316 = vunpack.c.l.b16 %v304
    %v317 = vpack.c.b16 %v312, %v311
    %v318 = vpack.c.b16 %v314, %v313
    %v319 = vpack.c.b16 %v316, %v315
    %vm323 = vcmask 392192
    %v325 = vsel %vm323, %v172, 0
    %327 = vmatpush.bf16.msra.mxu0 0
    %328 = vmatpush.bf16.msra.mxu0 0
    %329 = vmatpush.bf16.msra.mxu0 0
    %330 = vmatpush.bf16.msra.mxu0 0
    %331 = vmatpush.bf16.msra.mxu0 0
    %332 = vmatpush.bf16.msra.mxu0 %v319
    %333 = vmatpush.bf16.msra.mxu0 %v318
    %334 = vmatpush.bf16.msra.mxu0 %v317
    %335 = vmatmul.bf16.gmra.mxu0 %v325
    %v336 = vpop.f32.mrf.mxu0
    %v337 = vadd.f32 0.0, %v336
    %v338 = vpop.f32.mrf.mxu0
    %339 = vdwg.mxu0
    %v344 = vunpack.c.l.b16 %v295
    %v345 = vunpack.c.l.b16 %v296
    %v346 = vunpack.c.l.b16 %v297
    %v347 = vunpack.c.l.b16 %v298
    %v348 = vpack.c.b16 %v345, %v344
    %v349 = vpack.c.b16 %v347, %v346
    %352 = vmatpush.bf16.msra.mxu0 0
    %353 = vmatpush.bf16.msra.mxu0 0
    %354 = vmatpush.bf16.msra.mxu0 0
    %355 = vmatpush.bf16.msra.mxu0 0
    %356 = vmatpush.bf16.msra.mxu0 0
    %357 = vmatpush.bf16.msra.mxu0 0
    %358 = vmatpush.bf16.msra.mxu0 %v349
    %359 = vmatpush.bf16.msra.mxu0 %v348
    %360 = vmatmul.bf16.gmra.mxu0 %v195
    %v361 = vpop.f32.mrf.mxu0
    %v362 = vadd.f32 %v337, %v361
    %v363 = vpop.f32.mrf.mxu0
    %364 = vdwg.mxu0
    %v365 = vpack.c.bf16 %v288, %v288
    %v366 = vld [vmem:[#allocation14] sm:$0xf]
    %v367 = vld [vmem:[#allocation14 + $0x4] sm:$0xf]
    %v368 = vld [vmem:[#allocation14 + $0x8] sm:$0xf]
    %v369 = vld [vmem:[#allocation14 + $0xc] sm:$0xf]
    %371 = vrot.lane.b32.xlu0 %v365, 96
    %v372 = vpop.permute.xlu0 %371
    %v377 = vunpack.c.l.b16 %v366
    %v378 = vunpack.c.l.b16 %v367
    %v379 = vunpack.c.l.b16 %v368
    %v380 = vunpack.c.l.b16 %v369
    %v381 = vpack.c.b16 %v378, %v377
    %v382 = vpack.c.b16 %v380, %v379
    %v386 = vsel %vm193, %v372, 0
    %388 = vmatpush.bf16.msra.mxu0 0
    %389 = vmatpush.bf16.msra.mxu0 0
    %390 = vmatpush.bf16.msra.mxu0 0
    %391 = vmatpush.bf16.msra.mxu0 0
    %392 = vmatpush.bf16.msra.mxu0 0
    %393 = vmatpush.bf16.msra.mxu0 0
    %394 = vmatpush.bf16.msra.mxu0 %v382
    %395 = vmatpush.bf16.msra.mxu0 %v381
    %396 = vmatmul.bf16.gmra.mxu0 %v386
    %v397 = vpop.f32.mrf.mxu0
    %v398 = vadd.f32 0.0, %v397
    %v399 = vpop.f32.mrf.mxu0
    %400 = vdwg.mxu0
    %v401 = vadd.f32 %v362, %v398
    %v402 = vld [vmem:[%s10] sm:$0x1]
    %v404 = vperm.slane %v402, 0
    %v406 = vadd.f32 %v401, %v404
    %408 = vrot.lane.b32.xlu0 %v406, 96
    %v409 = vpop.permute.xlu0 %408
    %v411 = vmax.f32 %v406, %v409
    %v412 = vpack.c.bf16 %v411, %v411
    %vm413 = vcmask 253952
    %414 = vst.msk [vmem:[#allocation16] sm:$0x1] %vm413, %v412
    // Predicated region
    $region82: #{tpu_custom_call.1} parent=1 // pred_check
      _
    $region83: #{tpu_custom_call.1} parent=1 // pred_check_branch
      %416 = sbr.rel (0) target = $region85
    $region84: #{tpu_custom_call.1} parent=1 // pred_region
      %418 = vsyncadd [#allocation4], 0
      %s420 = sshll.u32 [#allocation16], 4
      %s421 = int_to_ptr.vmem [resolvable:$true] %s420
      %s422 = sshll.u32 %s12, 4
      %s423 = int_to_ptr.hbm [resolvable:$true] %s422
      %425 = dma.vmem_to_hbm [thread:$0]  %s421, 16, %s423, [#allocation4]
    $region85: #{tpu_custom_call.1} parent=1 // pred_fallthru
      _
    // Predicated region
    $region86: #{tpu_custom_call.1} parent=1 // pred_check
      _
    $region87: #{tpu_custom_call.1} parent=1 // pred_check_branch
      %427 = sbr.rel (0) target = $region89
    $region88: #{tpu_custom_call.1} parent=1 // pred_region
      %429 = vsyncadd [#allocation18], 0
      %s431 = sshll.u32 [#allocation17], 4
      %s432 = int_to_ptr.vmem [resolvable:$true] %s431
      %s433 = sshll.u32 %s13, 4
      %s434 = int_to_ptr.hbm [resolvable:$true] %s433
      %436 = dma.vmem_to_hbm [thread:$0]  %s432, 32, %s434, [#allocation18]
    $region89: #{tpu_custom_call.1} parent=1 // pred_fallthru
      _
    // Predicated region
    $region90: #{tpu_custom_call.1} parent=1 // pred_check
      _
    $region91: #{tpu_custom_call.1} parent=1 // pred_check_branch
      %438 = sbr.rel (0) target = $region93
    $region92: #{tpu_custom_call.1} parent=1 // pred_region
      %440 = dma.done [#allocation4], 16
    $region93: #{tpu_custom_call.1} parent=1 // pred_fallthru
      _
    // Predicated region
    $region94: #{tpu_custom_call.1} parent=1 // pred_check
      _
    $region95: #{tpu_custom_call.1} parent=1 // pred_check_branch
      %442 = sbr.rel (0) target = $region97
    $region96: #{tpu_custom_call.1} parent=1 // pred_region
      %444 = dma.done [#allocation18], 32
    $region97: #{tpu_custom_call.1} parent=1 // pred_fallthru
      _
    %445 = vsyncpa [#allocation3], 1
    %446 = vsyncpa [#allocation6], 1
    %447 = vsyncpa [#allocation9], 1
    %448 = vsyncpa [#allocation12], 1
    %449 = vsyncpa [#allocation15], 1
    %450 = vsyncpa [#allocation4], 1
    %451 = vsyncpa [#allocation18], 1

</llo_original>
